<compile_context>
chip_gen: v5e
topology: v5e:2x2
jax: 0.10.0
libtpu: 0.0.40
codegen_flags: <defaults>
</compile_context>

<pallas_src>
import jax
import jax.numpy as jnp
from jax.experimental import pallas as pl
from jax.experimental.pallas import tpu as pltpu


def _round_up(n: int, m: int) -> int:
    return ((n + m - 1) // m) * m


def _mlp_kernel(x_ref, wg_ref, wu_ref, wo_ref, o_ref, acc_ref):
    # x_ref  : [tm, Dp]   token tile (resident across the F-reduction axis)
    # wg_ref : [Dp, tf]   gate projection tile
    # wu_ref : [Dp, tf]   up projection tile
    # wo_ref : [tf, Dp]   down projection tile
    # o_ref  : [tm, Dp]   output tile (revisited across the F axis)
    # acc_ref: [tm, Dp]   f32 accumulator scratch
    k = pl.program_id(1)

    @pl.when(k == 0)
    def _():
        acc_ref[...] = jnp.zeros_like(acc_ref)

    x = x_ref[...]
    # Two lane-aligned MXU matmuls instead of one [tm, 2*tf] matmul followed by
    # a lane-misaligned gate/up split.
    gate = jnp.dot(x, wg_ref[...], preferred_element_type=jnp.float32)
    up = jnp.dot(x, wu_ref[...], preferred_element_type=jnp.float32)

    # silu_and_mul in f32, then cast explicitly to the down-projection weight
    # dtype for the second MXU matmul (matches hidden.to(compute_dtype)).
    hidden = (gate * jax.nn.sigmoid(gate) * up).astype(wo_ref.dtype)

    # Accumulate the down-projection directly into the f32 scratch; cast to the
    # output dtype only once, at the final reduction step.
    acc_ref[...] += jnp.dot(hidden, wo_ref[...], preferred_element_type=jnp.float32)

    @pl.when(k == pl.num_programs(1) - 1)
    def _():
        o_ref[...] = acc_ref[...].astype(o_ref.dtype)


def mlp_block(x, wi_fused, wo, *, tm: int = 256, tf: int = 512):
    """MlpBlock.forward (use_silu_mul=True).

    x        : [B, T, D]
    wi_fused : [D, 2F]   (wi_fused.weight layout of OptimizedLinear)
    wo       : [F, D]    (wo.weight layout of OptimizedLinear)
    returns  : [B, T, D]

    For large workloads, pass bf16 x / weights: the kernel keeps f32 MXU
    accumulation regardless of input dtype.
    """
    B, T, D = x.shape
    F = wi_fused.shape[1] // 2
    assert wo.shape == (F, D)
    M = B * T

    # Pre-split the fused projection so the kernel never slices the f32
    # intermediate at a non-128-aligned lane offset.
    wi_gate = wi_fused[:, :F]
    wi_up = wi_fused[:, F:]

    x2d = x.reshape(M, D)

    # Clamp tile sizes to the (padded) problem size; keep sublane/lane alignment.
    tm = min(tm, _round_up(M, 8))
    tf = min(tf, _round_up(F, 128))
    Mp = _round_up(M, tm)
    Fp = _round_up(F, tf)
    Dp = _round_up(D, 128)  # lane-dense output stores

    # Zero padding is numerically inert: silu(0) * 0 == 0 and padded wo
    # rows/cols are zero, so padded F/D contribute nothing; padded M rows are
    # sliced off at the end.
    if Mp != M or Dp != D:
        x2d = jnp.pad(x2d, ((0, Mp - M), (0, Dp - D)))
    if Dp != D or Fp != F:
        wi_gate = jnp.pad(wi_gate, ((0, Dp - D), (0, Fp - F)))
        wi_up = jnp.pad(wi_up, ((0, Dp - D), (0, Fp - F)))
        wo = jnp.pad(wo, ((0, Fp - F), (0, Dp - D)))

    grid = (Mp // tm, Fp // tf)

    # Rough double-buffered VMEM budget -> explicit limit with headroom, capped
    # below v7x's 64 MiB physical VMEM (safe on v5e/v6e's 128 MiB as well).
    a_bytes = jnp.dtype(x.dtype).itemsize
    w_bytes = jnp.dtype(wi_fused.dtype).itemsize
    vmem_bytes = (
        2 * (tm * Dp) * a_bytes          # x tile (double-buffered)
        + 2 * 2 * (Dp * tf) * w_bytes    # gate + up weight tiles
        + 2 * (tf * Dp) * w_bytes        # wo tile
        + 2 * (tm * Dp) * a_bytes        # output tile
        + (tm * Dp) * 4                  # f32 accumulator scratch
    )
    vmem_limit = int(min(max(2 * vmem_bytes + (4 << 20), 16 << 20), 64 << 20))

    out2d = pl.pallas_call(
        _mlp_kernel,
        out_shape=jax.ShapeDtypeStruct((Mp, Dp), x.dtype),
        grid_spec=pltpu.PrefetchScalarGridSpec(
            num_scalar_prefetch=0,
            grid=grid,
            in_specs=[
                # x tile: constant in k -> resident across the F reduction.
                pl.BlockSpec((tm, Dp), lambda i, k: (i, 0)),
                pl.BlockSpec((Dp, tf), lambda i, k: (0, k)),
                pl.BlockSpec((Dp, tf), lambda i, k: (0, k)),
                pl.BlockSpec((tf, Dp), lambda i, k: (k, 0)),
            ],
            # Same output block across k -> accumulator pattern.
            out_specs=pl.BlockSpec((tm, Dp), lambda i, k: (i, 0)),
            scratch_shapes=[pltpu.VMEM((tm, Dp), jnp.float32)],
        ),
        compiler_params=pltpu.CompilerParams(
            dimension_semantics=("parallel", "arbitrary"),
            vmem_limit_bytes=vmem_limit,
        ),
    )(x2d, wi_gate, wi_up, wo)

    return out2d[:M, :D].reshape(B, T, D)


def mlp_block_ref(x, wi_fused, wo):
    """Pure-JAX reference mirroring the PyTorch forward."""
    fused = jnp.dot(x.astype(wi_fused.dtype), wi_fused)
    d = fused.shape[-1] // 2
    gate, up = fused[..., :d], fused[..., d:]
    hidden = (jax.nn.silu(gate) * up).astype(x.dtype)
    return jnp.dot(hidden.astype(wo.dtype), wo).astype(x.dtype)


if __name__ == "__main__":
    # Small shapes consistent with the module: batch=2, seq=8,
    # embed_dim=32, intermediate_dim=64, compute_dtype=float32.
    B, T, D, F = 2, 8, 32, 64
    compute_dtype = jnp.float32

    key = jax.random.PRNGKey(0)
    kx, kwi, kwo = jax.random.split(key, 3)

    x = jax.random.normal(kx, (B, T, D), dtype=compute_dtype)
    # Deterministic synthetic parameters (module __init__ only defines shapes).
    wi_fused = (jax.random.normal(kwi, (D, 2 * F), dtype=compute_dtype)
                * (1.0 / jnp.sqrt(D)))
    wo = (jax.random.normal(kwo, (F, D), dtype=compute_dtype)
          * (1.0 / jnp.sqrt(F)))

    out = mlp_block(x, wi_fused, wo)
    out = jax.block_until_ready(out)

    ref = mlp_block_ref(x, wi_fused, wo)
    assert out.shape == (B, T, D)
    assert jnp.allclose(out, ref, atol=1e-4, rtol=1e-4), "mismatch vs reference"

    print("KERNEL_OK")
</pallas_src>

<mosaic_0001>
module attributes {stable_mosaic.version = 11 : i64} {
  func.func @_mlp_kernel(%arg0: i32, %arg1: i32, %arg2: memref<16x128xf32, #tpu.memory_space<vmem>>, %arg3: memref<128x128xf32, #tpu.memory_space<vmem>>, %arg4: memref<128x128xf32, #tpu.memory_space<vmem>>, %arg5: memref<128x128xf32, #tpu.memory_space<vmem>>, %arg6: memref<16x128xf32, #tpu.memory_space<vmem>>, %arg7: memref<16x128xf32, #tpu.memory_space<vmem>>) attributes {dimension_semantics = [#tpu.dimension_semantics<parallel>, #tpu.dimension_semantics<arbitrary>], iteration_bounds = array<i64: 1, 1>, scalar_prefetch = 0 : i64, scratch_operands = 1 : i64, tpu.core_type = #tpu.core_type<tc>, window_params = [{transform_indices = @transform_0, window_bounds = array<i64: 16, 128>}, {transform_indices = @transform_1, window_bounds = array<i64: 128, 128>}, {transform_indices = @transform_2, window_bounds = array<i64: 128, 128>}, {transform_indices = @transform_3, window_bounds = array<i64: 128, 128>}, {transform_indices = @transform_4, window_bounds = array<i64: 16, 128>}]} {
    %c0_i32 = arith.constant 0 : i32
    %0 = arith.cmpi eq, %arg1, %c0_i32 : i32
    %1 = arith.extui %0 : i1 to i32
    %c0_i32_0 = arith.constant 0 : i32
    %2 = arith.cmpi ne, %1, %c0_i32_0 : i32
    scf.if %2 {
      %cst_17 = arith.constant 0.000000e+00 : f32
      %23 = vector.broadcast %cst_17 : f32 to vector<16x128xf32>
      %c0_18 = arith.constant 0 : index
      %c0_19 = arith.constant 0 : index
      %24 = vector.load %arg7[%c0_18, %c0_19] : memref<16x128xf32, #tpu.memory_space<vmem>>, vector<16x128xf32>
      tpu.vector_store %arg7[%c0_18, %c0_19], %23 {strides = array<i32>} : memref<16x128xf32, #tpu.memory_space<vmem>>, vector<16x128xf32>,
    } else {
    }
    %c0 = arith.constant 0 : index
    %c0_1 = arith.constant 0 : index
    %3 = vector.load %arg2[%c0, %c0_1] : memref<16x128xf32, #tpu.memory_space<vmem>>, vector<16x128xf32>
    %c0_2 = arith.constant 0 : index
    %c0_3 = arith.constant 0 : index
    %4 = vector.load %arg3[%c0_2, %c0_3] : memref<128x128xf32, #tpu.memory_space<vmem>>, vector<128x128xf32>
    %cst = arith.constant dense<0.000000e+00> : vector<16x128xf32>
    %5 = tpu.matmul %3, %4, %cst {dimension_numbers = #tpu.dot_dimension_numbers<[1], [0], [0], [1], [0, 0, 1, 1], [], []>} : vector<16x128xf32>, vector<128x128xf32>, vector<16x128xf32> -> vector<16x128xf32>
    %c0_4 = arith.constant 0 : index
    %c0_5 = arith.constant 0 : index
    %6 = vector.load %arg4[%c0_4, %c0_5] : memref<128x128xf32, #tpu.memory_space<vmem>>, vector<128x128xf32>
    %cst_6 = arith.constant dense<0.000000e+00> : vector<16x128xf32>
    %7 = tpu.matmul %3, %6, %cst_6 {dimension_numbers = #tpu.dot_dimension_numbers<[1], [0], [0], [1], [0, 0, 1, 1], [], []>} : vector<16x128xf32>, vector<128x128xf32>, vector<16x128xf32> -> vector<16x128xf32>
    %8 = arith.negf %5 : vector<16x128xf32>
    %9 = math.exp %8 : vector<16x128xf32>
    %cst_7 = arith.constant 1.000000e+00 : f32
    %10 = vector.broadcast %cst_7 : f32 to vector<16x128xf32>
    %11 = arith.addf %10, %9 : vector<16x128xf32>
    %12 = arith.divf %10, %11 : vector<16x128xf32>
    %13 = arith.mulf %5, %12 : vector<16x128xf32>
    %14 = arith.mulf %13, %7 : vector<16x128xf32>
    %c0_8 = arith.constant 0 : index
    %c0_9 = arith.constant 0 : index
    %15 = vector.load %arg7[%c0_8, %c0_9] : memref<16x128xf32, #tpu.memory_space<vmem>>, vector<16x128xf32>
    %c0_10 = arith.constant 0 : index
    %c0_11 = arith.constant 0 : index
    %16 = vector.load %arg5[%c0_10, %c0_11] : memref<128x128xf32, #tpu.memory_space<vmem>>, vector<128x128xf32>
    %cst_12 = arith.constant dense<0.000000e+00> : vector<16x128xf32>
    %17 = tpu.matmul %14, %16, %cst_12 {dimension_numbers = #tpu.dot_dimension_numbers<[1], [0], [0], [1], [0, 0, 1, 1], [], []>} : vector<16x128xf32>, vector<128x128xf32>, vector<16x128xf32> -> vector<16x128xf32>
    %18 = arith.addf %15, %17 : vector<16x128xf32>
    %c0_13 = arith.constant 0 : index
    %c0_14 = arith.constant 0 : index
    %19 = vector.load %arg7[%c0_13, %c0_14] : memref<16x128xf32, #tpu.memory_space<vmem>>, vector<16x128xf32>
    tpu.vector_store %arg7[%c0_13, %c0_14], %18 {strides = array<i32>} : memref<16x128xf32, #tpu.memory_space<vmem>>, vector<16x128xf32>,
    %c0_i32_15 = arith.constant 0 : i32
    %20 = arith.cmpi eq, %arg1, %c0_i32_15 : i32
    %21 = arith.extui %20 : i1 to i32
    %c0_i32_16 = arith.constant 0 : i32
    %22 = arith.cmpi ne, %21, %c0_i32_16 : i32
    scf.if %22 {
      %c0_17 = arith.constant 0 : index
      %c0_18 = arith.constant 0 : index
      %23 = vector.load %arg7[%c0_17, %c0_18] : memref<16x128xf32, #tpu.memory_space<vmem>>, vector<16x128xf32>
      %c0_19 = arith.constant 0 : index
      %c0_20 = arith.constant 0 : index
      %24 = vector.load %arg6[%c0_19, %c0_20] : memref<16x128xf32, #tpu.memory_space<vmem>>, vector<16x128xf32>
      tpu.vector_store %arg6[%c0_19, %c0_20], %23 {strides = array<i32>} : memref<16x128xf32, #tpu.memory_space<vmem>>, vector<16x128xf32>,
    } else {
    }
    return
  }
  func.func @transform_0(%arg0: i32, %arg1: i32) -> (i32, i32) {
    %c0_i32 = arith.constant 0 : i32
    %c0_i32_0 = arith.constant 0 : i32
    return %arg0, %c0_i32 : i32, i32
  }
  func.func @transform_1(%arg0: i32, %arg1: i32) -> (i32, i32) {
    %c0_i32 = arith.constant 0 : i32
    %c0_i32_0 = arith.constant 0 : i32
    return %c0_i32, %arg1 : i32, i32
  }
  func.func @transform_2(%arg0: i32, %arg1: i32) -> (i32, i32) {
    %c0_i32 = arith.constant 0 : i32
    %c0_i32_0 = arith.constant 0 : i32
    return %c0_i32, %arg1 : i32, i32
  }
  func.func @transform_3(%arg0: i32, %arg1: i32) -> (i32, i32) {
    %c0_i32 = arith.constant 0 : i32
    %c0_i32_0 = arith.constant 0 : i32
    return %arg1, %c0_i32 : i32, i32
  }
  func.func @transform_4(%arg0: i32, %arg1: i32) -> (i32, i32) {
    %c0_i32 = arith.constant 0 : i32
    %c0_i32_0 = arith.constant 0 : i32
    return %arg0, %c0_i32 : i32, i32
  }
}

</mosaic_0001>

<llo_original>
// kernel: tpu_custom_call.1
$region0: #{tpu_custom_call.1}
  #allocation0 [shape = 'u32[]', space=smem, size = 0x4, offset = 0x4, fixed_abs, tag = 'smem constant byte address 0x4 - core index']
  #allocation1 [shape = 'u32[72,128]{1,0:T(1,128)}', space=vmem, size = 0x9000, scoped, tag = 'internal scratch']
  #allocation2 [shape = 'f32[16,128]{1,0:T(8,128)}', space=vmem, size = 0x2000, scoped, tag = 'scratch operand']
  %s0 = inlined_call_operand.hbm [shape: f32[16,128], index: 0, kind: input, shape index: {}]
  %s1 = inlined_call_operand.hbm [shape: f32[128,128], index: 1, kind: input, shape index: {}]
  %s2 = inlined_call_operand.hbm [shape: f32[128,128], index: 2, kind: input, shape index: {}]
  %s3 = inlined_call_operand.hbm [shape: f32[128,128], index: 3, kind: input, shape index: {}]
  %s4 = inlined_call_operand.hbm [shape: f32[16,128], index: 4, kind: output, shape index: {}]
  %s5 = sld [smem:[#allocation0]]
  $region50: #{tpu_custom_call.1} parent=0
    _
  %s7 = ssub.s32 1, %s5
  %s8 = scalar_select 0, %s7, %s5
  $region1: #{tpu_custom_call.1} parent=0
    #allocation3 [shape = 'u8[8192]{0}', space=vmem, size = 0x2000, scoped, tag = 'input window, operand 0, single buffered']
    #allocation4 [shape = 's32[1]{0}', space=sflag, size = 0x4, scoped, tag = 'scoped memory for tpu_custom_call.1']
    #allocation5 [shape = 's32[1]{0}', space=sflag, size = 0x4, scoped, tag = 'scoped memory for tpu_custom_call.1']
    #allocation6 [shape = 'u8[65536]{0}', space=vmem, size = 0x10000, scoped, tag = 'input window, operand 1, single buffered']
    #allocation7 [shape = 's32[1]{0}', space=sflag, size = 0x4, scoped, tag = 'scoped memory for tpu_custom_call.1']
    #allocation8 [shape = 'u8[65536]{0}', space=vmem, size = 0x10000, scoped, tag = 'input window, operand 2, single buffered']
    #allocation9 [shape = 'u8[65536]{0}', space=vmem, size = 0x10000, scoped, tag = 'input window, operand 3, single buffered']
    #allocation10 [shape = 's32[1]{0}', space=sflag, size = 0x4, scoped, tag = 'scoped memory for tpu_custom_call.1']
    #allocation11 [shape = 'u8[8192]{0}', space=vmem, size = 0x2000, scoped, tag = 'output window, operand 0, single buffered']
    %9 = vsyncpa [#allocation4], 0
    %10 = vsyncpa [#allocation7], 0
    %11 = vsyncpa [#allocation10], 0
    %12 = vsyncpa [#allocation5], 0
    // Predicated region
    $region2: #{tpu_custom_call.1} parent=1 // pred_check
      _
    $region3: #{tpu_custom_call.1} parent=1 // pred_check_branch
      %14 = sbr.rel (0) target = $region5
    $region4: #{tpu_custom_call.1} parent=1 // pred_region
      %16 = vsyncadd [#allocation4], 0
      %s17 = sshll.u32 %s0, 4
      %s18 = int_to_ptr.hbm [resolvable:$true] %s17
      %s19 = sshll.u32 [#allocation3], 4
      %s20 = int_to_ptr.vmem [resolvable:$true] %s19
      %25 = dma.hbm_to_vmem [thread:$0]  %s18, 256, %s20, [#allocation4], 128, 128, 8
    $region5: #{tpu_custom_call.1} parent=1 // pred_fallthru
      _
    // Predicated region
    $region6: #{tpu_custom_call.1} parent=1 // pred_check
      _
    $region7: #{tpu_custom_call.1} parent=1 // pred_check_branch
      %27 = sbr.rel (0) target = $region9
    $region8: #{tpu_custom_call.1} parent=1 // pred_region
      %29 = vsyncadd [#allocation7], 0
      %s30 = sshll.u32 %s1, 4
      %s31 = int_to_ptr.hbm [resolvable:$true] %s30
      %s32 = sshll.u32 [#allocation6], 4
      %s33 = int_to_ptr.vmem [resolvable:$true] %s32
      %38 = dma.hbm_to_vmem [thread:$0]  %s31, 2048, %s33, [#allocation7], 128, 128, 8
    $region9: #{tpu_custom_call.1} parent=1 // pred_fallthru
      _
    // Predicated region
    $region10: #{tpu_custom_call.1} parent=1 // pred_check
      _
    $region11: #{tpu_custom_call.1} parent=1 // pred_check_branch
      %40 = sbr.rel (0) target = $region13
    $region12: #{tpu_custom_call.1} parent=1 // pred_region
      %42 = vsyncadd [#allocation7], 0
      %s43 = sshll.u32 %s2, 4
      %s44 = int_to_ptr.hbm [resolvable:$true] %s43
      %s45 = sshll.u32 [#allocation8], 4
      %s46 = int_to_ptr.vmem [resolvable:$true] %s45
      %51 = dma.hbm_to_vmem [thread:$0]  %s44, 2048, %s46, [#allocation7], 128, 128, 8
    $region13: #{tpu_custom_call.1} parent=1 // pred_fallthru
      _
    // Predicated region
    $region14: #{tpu_custom_call.1} parent=1 // pred_check
      _
    $region15: #{tpu_custom_call.1} parent=1 // pred_check_branch
      %53 = sbr.rel (0) target = $region17
    $region16: #{tpu_custom_call.1} parent=1 // pred_region
      %55 = vsyncadd [#allocation10], 0
      %s56 = sshll.u32 %s3, 4
      %s57 = int_to_ptr.hbm [resolvable:$true] %s56
      %s58 = sshll.u32 [#allocation9], 4
      %s59 = int_to_ptr.vmem [resolvable:$true] %s58
      %64 = dma.hbm_to_vmem [thread:$0]  %s57, 2048, %s59, [#allocation10], 128, 128, 8
    $region17: #{tpu_custom_call.1} parent=1 // pred_fallthru
      _
    // Predicated region
    $region18: #{tpu_custom_call.1} parent=1 // pred_check
      _
    $region19: #{tpu_custom_call.1} parent=1 // pred_check_branch
      %66 = sbr.rel (0) target = $region21
    $region20: #{tpu_custom_call.1} parent=1 // pred_region
      %68 = dma.done [#allocation4], 256
    $region21: #{tpu_custom_call.1} parent=1 // pred_fallthru
      _
    // Predicated region
    $region22: #{tpu_custom_call.1} parent=1 // pred_check
      _
    $region23: #{tpu_custom_call.1} parent=1 // pred_check_branch
      %70 = sbr.rel (0) target = $region25
    $region24: #{tpu_custom_call.1} parent=1 // pred_region
      %72 = dma.done [#allocation7], 2048
    $region25: #{tpu_custom_call.1} parent=1 // pred_fallthru
      _
    // Predicated region
    $region26: #{tpu_custom_call.1} parent=1 // pred_check
      _
    $region27: #{tpu_custom_call.1} parent=1 // pred_check_branch
      %74 = sbr.rel (0) target = $region29
    $region28: #{tpu_custom_call.1} parent=1 // pred_region
      %76 = dma.done [#allocation7], 2048
    $region29: #{tpu_custom_call.1} parent=1 // pred_fallthru
      _
    // Predicated region
    $region30: #{tpu_custom_call.1} parent=1 // pred_check
      _
    $region31: #{tpu_custom_call.1} parent=1 // pred_check_branch
      %78 = sbr.rel (0) target = $region33
    $region32: #{tpu_custom_call.1} parent=1 // pred_region
      %80 = dma.done [#allocation10], 2048
    $region33: #{tpu_custom_call.1} parent=1 // pred_fallthru
      _
    %p81 = scmp.eq.s32.totalorder 0, 0
    // Predicated region
    $region34: #{tpu_custom_call.1} parent=1 // pred_check
      %p82 = pneg %p81
    $region35: #{tpu_custom_call.1} parent=1 // pred_check_branch
      %84 = sbr.rel (%p82) target = $region37
    $region36: #{tpu_custom_call.1} parent=1 // pred_region
      %85 = vst [vmem:[#allocation2] sm:$0xff] 0.0
      %86 = vst [vmem:[#allocation2 + $0x8] sm:$0xff] 0.0
    $region37: #{tpu_custom_call.1} parent=1 // pred_fallthru
      _
    %v87 = vld [vmem:[#allocation3] sm:$0xff]
    %v88 = vld [vmem:[#allocation3 + $0x8] sm:$0xff]
    %v89 = vld [vmem:[#allocation6] sm:$0xff]
    %v90 = vld [vmem:[#allocation6 + $0x8] sm:$0xff]
    %v91 = vld [vmem:[#allocation6 + $0x10] sm:$0xff]
    %v92 = vld [vmem:[#allocation6 + $0x18] sm:$0xff]
    %v93 = vld [vmem:[#allocation6 + $0x20] sm:$0xff]
    %v94 = vld [vmem:[#allocation6 + $0x28] sm:$0xff]
    %v95 = vld [vmem:[#allocation6 + $0x30] sm:$0xff]
    %v96 = vld [vmem:[#allocation6 + $0x38] sm:$0xff]
    %v97 = vld [vmem:[#allocation6 + $0x40] sm:$0xff]
    %v98 = vld [vmem:[#allocation6 + $0x48] sm:$0xff]
    %v99 = vld [vmem:[#allocation6 + $0x50] sm:$0xff]
    %v100 = vld [vmem:[#allocation6 + $0x58] sm:$0xff]
    %v101 = vld [vmem:[#allocation6 + $0x60] sm:$0xff]
    %v102 = vld [vmem:[#allocation6 + $0x68] sm:$0xff]
    %v103 = vld [vmem:[#allocation6 + $0x70] sm:$0xff]
    %v104 = vld [vmem:[#allocation6 + $0x78] sm:$0xff]
    %105 = vmatpush.msra.mxu0 %v104
    %106 = vmatpush.msra.mxu0 %v103
    %107 = vmatpush.msra.mxu0 %v102
    %108 = vmatpush.msra.mxu0 %v101
    %109 = vmatpush.msra.mxu0 %v100
    %110 = vmatpush.msra.mxu0 %v99
    %111 = vmatpush.msra.mxu0 %v98
    %112 = vmatpush.msra.mxu0 %v97
    %113 = vmatpush.msra.mxu0 %v96
    %114 = vmatpush.msra.mxu0 %v95
    %115 = vmatpush.msra.mxu0 %v94
    %116 = vmatpush.msra.mxu0 %v93
    %117 = vmatpush.msra.mxu0 %v92
    %118 = vmatpush.msra.mxu0 %v91
    %119 = vmatpush.msra.mxu0 %v90
    %120 = vmatpush.msra.mxu0 %v89
    %121 = vmatmul.f32.gmra.mxu0 %v87
    %v122 = vpop.f32.mrf.mxu0
    %v123 = vadd.f32 0.0, %v122
    %124 = vmatmul.f32.gmra.mxu0 %v88
    %v125 = vpop.f32.mrf.mxu0
    %v126 = vadd.f32 0.0, %v125
    %127 = vdwg.mxu0
    %v128 = vld [vmem:[#allocation8] sm:$0xff]
    %v129 = vld [vmem:[#allocation8 + $0x8] sm:$0xff]
    %v130 = vld [vmem:[#allocation8 + $0x10] sm:$0xff]
    %v131 = vld [vmem:[#allocation8 + $0x18] sm:$0xff]
    %v132 = vld [vmem:[#allocation8 + $0x20] sm:$0xff]
    %v133 = vld [vmem:[#allocation8 + $0x28] sm:$0xff]
    %v134 = vld [vmem:[#allocation8 + $0x30] sm:$0xff]
    %v135 = vld [vmem:[#allocation8 + $0x38] sm:$0xff]
    %v136 = vld [vmem:[#allocation8 + $0x40] sm:$0xff]
    %v137 = vld [vmem:[#allocation8 + $0x48] sm:$0xff]
    %v138 = vld [vmem:[#allocation8 + $0x50] sm:$0xff]
    %v139 = vld [vmem:[#allocation8 + $0x58] sm:$0xff]
    %v140 = vld [vmem:[#allocation8 + $0x60] sm:$0xff]
    %v141 = vld [vmem:[#allocation8 + $0x68] sm:$0xff]
    %v142 = vld [vmem:[#allocation8 + $0x70] sm:$0xff]
    %v143 = vld [vmem:[#allocation8 + $0x78] sm:$0xff]
    %144 = vmatpush.msra.mxu0 %v143
    %145 = vmatpush.msra.mxu0 %v142
    %146 = vmatpush.msra.mxu0 %v141
    %147 = vmatpush.msra.mxu0 %v140
    %148 = vmatpush.msra.mxu0 %v139
    %149 = vmatpush.msra.mxu0 %v138
    %150 = vmatpush.msra.mxu0 %v137
    %151 = vmatpush.msra.mxu0 %v136
    %152 = vmatpush.msra.mxu0 %v135
    %153 = vmatpush.msra.mxu0 %v134
    %154 = vmatpush.msra.mxu0 %v133
    %155 = vmatpush.msra.mxu0 %v132
    %156 = vmatpush.msra.mxu0 %v131
    %157 = vmatpush.msra.mxu0 %v130
    %158 = vmatpush.msra.mxu0 %v129
    %159 = vmatpush.msra.mxu0 %v128
    %160 = vmatmul.f32.gmra.mxu0 %v87
    %v161 = vpop.f32.mrf.mxu0
    %v162 = vadd.f32 0.0, %v161
    %163 = vmatmul.f32.gmra.mxu0 %v88
    %v164 = vpop.f32.mrf.mxu0
    %v165 = vadd.f32 0.0, %v164
    %166 = vdwg.mxu0
    %v167 = vxor.u32 %v123, 2147483648
    %v168 = vxor.u32 %v126, 2147483648
    %v169 = vmul.f32 %v167, 1.442695
    %v170 = vpow.pop %v169
    %v171 = vmul.f32 %v168, 1.442695
    %v172 = vpow.pop %v171
    %v173 = vadd.f32 %v170, 1.0
    %v174 = vadd.f32 %v172, 1.0
    %v175 = vrcp.pop %v173
    %v176 = vmul.f32 %v173, %v175
    %v177 = vsub.f32 1.0, %v176
    %v178 = vmul.f32 %v175, %v177
    %v179 = vadd.f32 %v175, %v178
    %vm180 = vweird.f32 %v173
    %vm181 = vweird.f32 %v175
    %vm182 = vmor %vm180, %vm181
    %v183 = vsel %vm182, %v175, %v179
    %v184 = vand.u32 2147483647, %v173
    %vm185 = vcmp.eq.f32.partialorder %v184, 8.507059e+37
    %v186 = vand.u32 %v173, 2147483648
    %v187 = vor.u32 1.1754944e-38, %v186
    %v188 = vsel %vm185, %v187, %v183
    %v189 = vmul.f32 1.0, %v188
    %v190 = vrcp.pop %v174
    %v191 = vmul.f32 %v174, %v190
    %v192 = vsub.f32 1.0, %v191
    %v193 = vmul.f32 %v190, %v192
    %v194 = vadd.f32 %v190, %v193
    %vm195 = vweird.f32 %v174
    %vm196 = vweird.f32 %v190
    %vm197 = vmor %vm195, %vm196
    %v198 = vsel %vm197, %v190, %v194
    %v199 = vand.u32 2147483647, %v174
    %vm200 = vcmp.eq.f32.partialorder %v199, 8.507059e+37
    %v201 = vand.u32 %v174, 2147483648
    %v202 = vor.u32 1.1754944e-38, %v201
    %v203 = vsel %vm200, %v202, %v198
    %v204 = vmul.f32 1.0, %v203
    %v205 = vmul.f32 %v123, %v189
    %v206 = vmul.f32 %v126, %v204
    %v207 = vmul.f32 %v205, %v162
    %v208 = vmul.f32 %v206, %v165
    %v209 = vld [vmem:[#allocation2] sm:$0xff]
    %v210 = vld [vmem:[#allocation2 + $0x8] sm:$0xff]
    %v211 = vld [vmem:[#allocation9] sm:$0xff]
    %v212 = vld [vmem:[#allocation9 + $0x8] sm:$0xff]
    %v213 = vld [vmem:[#allocation9 + $0x10] sm:$0xff]
    %v214 = vld [vmem:[#allocation9 + $0x18] sm:$0xff]
    %v215 = vld [vmem:[#allocation9 + $0x20] sm:$0xff]
    %v216 = vld [vmem:[#allocation9 + $0x28] sm:$0xff]
    %v217 = vld [vmem:[#allocation9 + $0x30] sm:$0xff]
    %v218 = vld [vmem:[#allocation9 + $0x38] sm:$0xff]
    %v219 = vld [vmem:[#allocation9 + $0x40] sm:$0xff]
    %v220 = vld [vmem:[#allocation9 + $0x48] sm:$0xff]
    %v221 = vld [vmem:[#allocation9 + $0x50] sm:$0xff]
    %v222 = vld [vmem:[#allocation9 + $0x58] sm:$0xff]
    %v223 = vld [vmem:[#allocation9 + $0x60] sm:$0xff]
    %v224 = vld [vmem:[#allocation9 + $0x68] sm:$0xff]
    %v225 = vld [vmem:[#allocation9 + $0x70] sm:$0xff]
    %v226 = vld [vmem:[#allocation9 + $0x78] sm:$0xff]
    %227 = vmatpush.msra.mxu0 %v226
    %228 = vmatpush.msra.mxu0 %v225
    %229 = vmatpush.msra.mxu0 %v224
    %230 = vmatpush.msra.mxu0 %v223
    %231 = vmatpush.msra.mxu0 %v222
    %232 = vmatpush.msra.mxu0 %v221
    %233 = vmatpush.msra.mxu0 %v220
    %234 = vmatpush.msra.mxu0 %v219
    %235 = vmatpush.msra.mxu0 %v218
    %236 = vmatpush.msra.mxu0 %v217
    %237 = vmatpush.msra.mxu0 %v216
    %238 = vmatpush.msra.mxu0 %v215
    %239 = vmatpush.msra.mxu0 %v214
    %240 = vmatpush.msra.mxu0 %v213
    %241 = vmatpush.msra.mxu0 %v212
    %242 = vmatpush.msra.mxu0 %v211
    %243 = vmatmul.f32.gmra.mxu0 %v207
    %v244 = vpop.f32.mrf.mxu0
    %v245 = vadd.f32 0.0, %v244
    %246 = vmatmul.f32.gmra.mxu0 %v208
    %v247 = vpop.f32.mrf.mxu0
    %v248 = vadd.f32 0.0, %v247
    %249 = vdwg.mxu0
    %v250 = vadd.f32 %v209, %v245
    %v251 = vadd.f32 %v210, %v248
    %252 = vst [vmem:[#allocation2] sm:$0xff] %v250
    %253 = vst [vmem:[#allocation2 + $0x8] sm:$0xff] %v251
    // Predicated region
    $region38: #{tpu_custom_call.1} parent=1 // pred_check
      %p254 = pneg %p81
    $region39: #{tpu_custom_call.1} parent=1 // pred_check_branch
      %256 = sbr.rel (%p254) target = $region41
    $region40: #{tpu_custom_call.1} parent=1 // pred_region
      %v257 = vld [vmem:[#allocation2] sm:$0xff]
      %v258 = vld [vmem:[#allocation2 + $0x8] sm:$0xff]
      %259 = vst [vmem:[#allocation11] sm:$0xff] %v257
      %260 = vst [vmem:[#allocation11 + $0x8] sm:$0xff] %v258
    $region41: #{tpu_custom_call.1} parent=1 // pred_fallthru
      _
    // Predicated region
    $region42: #{tpu_custom_call.1} parent=1 // pred_check
      _
    $region43: #{tpu_custom_call.1} parent=1 // pred_check_branch
      %262 = sbr.rel (0) target = $region45
    $region44: #{tpu_custom_call.1} parent=1 // pred_region
      %264 = vsyncadd [#allocation5], 0
      %s265 = sshll.u32 [#allocation11], 4
      %s266 = int_to_ptr.vmem [resolvable:$true] %s265
      %s267 = sshll.u32 %s4, 4
      %s268 = int_to_ptr.hbm [resolvable:$true] %s267
      %273 = dma.vmem_to_hbm [thread:$0]  %s266, 256, %s268, [#allocation5], 128, 128, 8
    $region45: #{tpu_custom_call.1} parent=1 // pred_fallthru
      _
    // Predicated region
    $region46: #{tpu_custom_call.1} parent=1 // pred_check
      _
    $region47: #{tpu_custom_call.1} parent=1 // pred_check_branch
      %275 = sbr.rel (0) target = $region49
    $region48: #{tpu_custom_call.1} parent=1 // pred_region
      %277 = dma.done [#allocation5], 256
    $region49: #{tpu_custom_call.1} parent=1 // pred_fallthru
      _
    %278 = vsyncpa [#allocation4], 1
    %279 = vsyncpa [#allocation7], 1
    %280 = vsyncpa [#allocation10], 1
    %281 = vsyncpa [#allocation5], 1

</llo_original>
